<compile_context>
chip_gen: v7x
topology: tpu7x:2x2x1
jax: 0.10.0
libtpu: 0.0.40
codegen_flags: <defaults>
</compile_context>

<pallas_src>
import math

import jax
import jax.numpy as jnp
from jax.experimental import pallas as pl
from jax.experimental.pallas import tpu as pltpu

K_MIX = 5
KSIZE = 3
DILATIONS = (1, 2, 4)   # 2**i for the 3 TCN blocks


def _gelu_exact(x):
    # nn.GELU() default = exact erf formulation.
    return 0.5 * x * (1.0 + jax.lax.erf(x * (1.0 / math.sqrt(2.0))))


# --------------------------------- kernel ---------------------------------

def tcn_mdn_kernel(x_ref,
                   w1_ref, b1_ref, w2_ref, b2_ref, w3_ref, b3_ref,
                   gamma_ref, beta_ref, whead_ref, bhead_ref, sigmask_ref,
                   out_ref,
                   stack1_ref, stack2_ref, stack3_ref):
    """One batch row per grid step.  x_ref: (T, F) f32; out_ref: (1, P_pad)."""
    T = x_ref.shape[0]

    def stacked_taps(dst_ref, h, dilation):
        # Write the K causal-shifted copies of h (T, Cin) into dst_ref
        # (T, K*Cin) with shifted stores -- no time or channel concatenates.
        cin = h.shape[-1]
        dst_ref[...] = jnp.zeros_like(dst_ref)            # causal zero padding
        for k in range(KSIZE):
            s = (KSIZE - 1 - k) * dilation                # static shift
            if s == 0:
                dst_ref[:, k * cin:(k + 1) * cin] = h
            elif s < T:
                dst_ref[s:, k * cin:(k + 1) * cin] = h[:T - s, :]
            # else: tap entirely out of range -> stays zero
        return dst_ref[...]

    def conv_block(dst_ref, h, w_ref, b_ref, dilation):
        # Causal dilated Conv1d with all K taps fused into one bf16 MXU matmul.
        stacked = stacked_taps(dst_ref, h, dilation)       # (T, K*Cin) f32
        return jnp.dot(stacked.astype(jnp.bfloat16), w_ref[...],
                       preferred_element_type=jnp.float32) + b_ref[...]

    x = x_ref[...]                                         # (T, F) f32

    # --- TCN block 1: conv taps + fused 1x1 downsample residual -> (T, 2C) ---
    o1 = conv_block(stack1_ref, x, w1_ref, b1_ref, DILATIONS[0])
    C = o1.shape[-1] // 2
    # TODO(synk): nn.Dropout is a no-op in eval mode; intentionally omitted.
    h1 = _gelu_exact(o1[:, :C]) + o1[:, C:]                # gelu(conv) + res

    # --- TCN block 2 (dilation 2; identity residual) ---
    o2 = conv_block(stack2_ref, h1, w2_ref, b2_ref, DILATIONS[1])
    h2 = _gelu_exact(o2) + h1

    # --- TCN block 3 (dilation 4; identity residual) ---
    o3 = conv_block(stack3_ref, h2, w3_ref, b3_ref, DILATIONS[2])
    h3 = _gelu_exact(o3) + h2                              # (T, C)

    # --- last timestep + LayerNorm (eps = 1e-5, PyTorch default) ---
    hl = h3[T - 1:T, :]                                    # (1, C)
    mean = jnp.mean(hl, axis=-1, keepdims=True)
    var = jnp.mean((hl - mean) ** 2, axis=-1, keepdims=True)
    hn = (hl - mean) * jax.lax.rsqrt(var + 1e-5) * gamma_ref[...] + beta_ref[...]

    # --- fused MDN heads: one lane-dense matmul + precomputed sigma mask ---
    raw = jnp.dot(hn.astype(jnp.bfloat16), whead_ref[...],
                  preferred_element_type=jnp.float32) + bhead_ref[...]  # (1, P_pad)
    mask = sigmask_ref[...]                                # 1.0 on sigma columns
    out_ref[...] = raw + mask * (jax.nn.softplus(raw) + 1e-6 - raw)


# ------------------------------ host wrapper ------------------------------

def tcn_mdn_forward(x, kernel_params, n_mix):
    B, T, F = x.shape
    M = n_mix
    P = M + 2 * M * F                         # pi | mu | sigma packed width
    C = kernel_params[2].shape[-1]            # w2 packed is (K*C, C)
    P_pad = kernel_params[8].shape[-1]        # lane-padded head width

    # Weights: whole-array VMEM placement -> DMA'd once, resident across the
    # (parallel) batch grid.  x / out are blocked per batch row (dim squeezed).
    weight_spec = pl.BlockSpec(memory_space=pltpu.MemorySpace.VMEM)

    # Scaling note (review): for large B, switch to batch *tiles* (bt, T, F)
    # sized to the per-generation scoped-VMEM budget (v7x: 64 MiB total /
    # 32 MiB default scoped vs 128 MiB on v5e/v6e); never tile T (the dilated
    # causal shifts would need a (K-1)*(1+2+4)=14-row halo); raise
    # vmem_limit_bytes via pltpu.CompilerParams if above the scoped default.
    out = pl.pallas_call(
        tcn_mdn_kernel,
        out_shape=jax.ShapeDtypeStruct((B, 1, P_pad), jnp.float32),
        grid=(B,),
        in_specs=[pl.BlockSpec((None, T, F), lambda b: (b, 0, 0))]
                 + [weight_spec] * (len(kernel_params)),
        out_specs=pl.BlockSpec((None, 1, P_pad), lambda b: (b, 0, 0)),
        scratch_shapes=[
            pltpu.VMEM((T, KSIZE * F), jnp.float32),   # block-1 tap stack
            pltpu.VMEM((T, KSIZE * C), jnp.float32),   # block-2 tap stack
            pltpu.VMEM((T, KSIZE * C), jnp.float32),   # block-3 tap stack
        ],
        compiler_params=pltpu.CompilerParams(
            dimension_semantics=("parallel",)),        # uses both TCs on v7x
    )(x, *kernel_params)

    out = out.reshape(B, P_pad)
    pi_logits = out[:, :M]
    mu = out[:, M:M + M * F].reshape(B, M, F)
    sigma = out[:, M + M * F:P].reshape(B, M, F)
    # TODO(synk): torch.distributions.MixtureSameFamily has no Pallas
    # equivalent; we return its defining parameters (pi_logits, mu, sigma).
    return pi_logits, mu, sigma


# --------------------------- deterministic init ---------------------------

def init_params(key, n_feats, channels, ksize, n_mix):
    ks = iter(jax.random.split(key, 8))

    def wn_conv(k, out_ch, in_ch, ksz):
        k1, k2, k3 = jax.random.split(k, 3)
        v = jax.random.normal(k1, (out_ch, in_ch, ksz), jnp.float32) * 0.3
        g = 0.5 + jax.random.uniform(k2, (out_ch,), jnp.float32)
        norm = jnp.sqrt(jnp.sum(v * v, axis=(1, 2), keepdims=True))
        w = g[:, None, None] * v / norm          # weight_norm effective weight (O, I, K)
        b = jax.random.normal(k3, (out_ch,), jnp.float32) * 0.1
        return w, b

    def linear(k, out_f, in_f):
        k1, k2 = jax.random.split(k, 2)
        w = jax.random.normal(k1, (out_f, in_f), jnp.float32) * 0.2   # torch (out, in)
        b = jax.random.normal(k2, (out_f,), jnp.float32) * 0.1
        return w, b

    assert channels[0] == channels[1] == channels[2]
    C = channels[-1]
    w1, b1 = wn_conv(next(ks), channels[0], n_feats, ksize)
    wd, bd = linear(next(ks), channels[0], n_feats)   # 1x1 downsample conv == per-step linear
    w2, b2 = wn_conv(next(ks), channels[1], channels[0], ksize)
    w3, b3 = wn_conv(next(ks), channels[2], channels[1], ksize)
    gamma = jnp.ones((C,), jnp.float32)               # nn.LayerNorm defaults
    beta = jnp.zeros((C,), jnp.float32)
    wpi, bpi = linear(next(ks), n_mix, C)
    wmu, bmu = linear(next(ks), n_mix * n_feats, C)
    wsg, bsg = linear(next(ks), n_mix * n_feats, C)

    torch_params = dict(w1=w1, b1=b1, wd=wd, bd=bd, w2=w2, b2=b2, w3=w3, b3=b3,
                        gamma=gamma, beta=beta, wpi=wpi, bpi=bpi, wmu=wmu,
                        bmu=bmu, wsg=wsg, bsg=bsg)

    # ---------------- kernel-side packing ----------------
    def pack_conv(w_oik):
        # torch (O, I, K) -> (K*I, O); tap k's (I, O) block stacked along rows,
        # k = 0 first (matches the in-kernel shifted tap stack order).
        return jnp.concatenate([w_oik[:, :, k].T for k in range(w_oik.shape[2])],
                               axis=0)

    # Block-1: conv taps + 1x1 downsample residual fused into one (K*F, 2C)
    # matmul.  The unshifted input is tap k = K-1, so wd lives in its rows.
    w1e = jnp.zeros((ksize * n_feats, 2 * C), jnp.float32)
    w1e = w1e.at[:, :C].set(pack_conv(w1))
    w1e = w1e.at[(ksize - 1) * n_feats:, C:].set(wd.T)
    b1e = jnp.concatenate([b1, bd])[None, :]                       # (1, 2C)

    # Fused MDN head: [pi | mu | sigma] columns, zero-padded to 128 lanes so
    # the kernel writes one lane-dense output slab.
    whead = jnp.concatenate([wpi.T, wmu.T, wsg.T], axis=1)         # (C, P)
    bhead = jnp.concatenate([bpi, bmu, bsg])                       # (P,)
    P = whead.shape[1]
    P_pad = ((P + 127) // 128) * 128
    whead = jnp.pad(whead, ((0, 0), (0, P_pad - P)))
    bhead = jnp.pad(bhead, (0, P_pad - P))[None, :]
    sig_lo, sig_hi = n_mix + n_mix * n_feats, P
    sigmask = jnp.zeros((1, P_pad), jnp.float32).at[0, sig_lo:sig_hi].set(1.0)

    bf16 = lambda a: a.astype(jnp.bfloat16)   # MXU-native operand dtype
    kernel_params = [
        bf16(w1e), b1e,
        bf16(pack_conv(w2)), b2[None, :],
        bf16(pack_conv(w3)), b3[None, :],
        gamma[None, :], beta[None, :],
        bf16(whead), bhead, sigmask,
    ]
    return torch_params, kernel_params


# ------------------------- pure-JAX reference model ------------------------

def reference_forward(x, p, n_mix, n_feats, bf16_matmuls=False):
    """Reference of the torch module.  bf16_matmuls=True mirrors the kernel's
    bf16-operand / f32-accumulate matmuls for a tight structural check."""
    f32 = jnp.float32
    cast = (lambda a: a.astype(jnp.bfloat16)) if bf16_matmuls else (lambda a: a)

    def ccv(h, w, b, d):
        pad = (w.shape[2] - 1) * d
        y = jax.lax.conv_general_dilated(
            cast(jnp.transpose(h, (0, 2, 1))), cast(w), (1,), [(pad, 0)],
            rhs_dilation=(d,), dimension_numbers=("NCH", "OIH", "NCH"),
            preferred_element_type=f32)
        return jnp.transpose(y, (0, 2, 1)) + b[None, None, :]

    h = x
    o = _gelu_exact(ccv(h, p["w1"], p["b1"], DILATIONS[0]))
    res = jnp.einsum("bti,oi->bto", cast(h), cast(p["wd"]),
                     preferred_element_type=f32) + p["bd"]
    h = o + res
    o = _gelu_exact(ccv(h, p["w2"], p["b2"], DILATIONS[1])); h = o + h
    o = _gelu_exact(ccv(h, p["w3"], p["b3"], DILATIONS[2])); h = o + h
    hl = h[:, -1, :]
    mean = jnp.mean(hl, axis=-1, keepdims=True)
    var = jnp.mean((hl - mean) ** 2, axis=-1, keepdims=True)
    hn = (hl - mean) * jax.lax.rsqrt(var + 1e-5) * p["gamma"] + p["beta"]

    def lin(w, b):
        return jnp.dot(cast(hn), cast(w.T), preferred_element_type=f32) + b

    pi = lin(p["wpi"], p["bpi"])
    mu = lin(p["wmu"], p["bmu"]).reshape(-1, n_mix, n_feats)
    sig = jax.nn.softplus(lin(p["wsg"], p["bsg"])).reshape(-1, n_mix, n_feats) + 1e-6
    return pi, mu, sig


# ----------------------------------- main ----------------------------------

if __name__ == "__main__":
    B, T, NFEATS = 2, 16, 4
    CHANNELS = [32, 32, 32]

    key = jax.random.PRNGKey(0)
    kx, kp = jax.random.split(key)
    x = jax.random.normal(kx, (B, T, NFEATS), jnp.float32)

    torch_params, kernel_params = init_params(kp, NFEATS, CHANNELS, KSIZE, K_MIX)

    pi_logits, mu, sigma = tcn_mdn_forward(x, kernel_params, K_MIX)
    jax.block_until_ready((pi_logits, mu, sigma))

    # Structural check: reference with identically-placed bf16 matmul operands.
    mpi, mmu, msig = reference_forward(x, torch_params, K_MIX, NFEATS,
                                       bf16_matmuls=True)
    # End-to-end sanity check: full-f32, highest-precision reference (loose
    # tolerance only reflects the intentional bf16 MXU operands in the kernel).
    with jax.default_matmul_precision("highest"):
        rpi, rmu, rsig = reference_forward(x, torch_params, K_MIX, NFEATS,
                                           bf16_matmuls=False)
    jax.block_until_ready((mpi, mmu, msig, rpi, rmu, rsig))

    assert pi_logits.shape == (B, K_MIX)
    assert mu.shape == (B, K_MIX, NFEATS)
    assert sigma.shape == (B, K_MIX, NFEATS)
    for got, want in ((pi_logits, mpi), (mu, mmu), (sigma, msig)):
        assert bool(jnp.allclose(got, want, rtol=2e-3, atol=2e-3))
    for got, want in ((pi_logits, rpi), (mu, rmu), (sigma, rsig)):
        assert bool(jnp.allclose(got, want, rtol=5e-2, atol=5e-2))

    print("KERNEL_OK")
</pallas_src>

<mosaic_0001>
module attributes {stable_mosaic.version = 11 : i64} {
  func.func @tcn_mdn_kernel(%arg0: i32, %arg1: memref<1x16x4xf32, #tpu.memory_space<vmem>>, %arg2: memref<12x64xbf16, #tpu.memory_space<vmem>>, %arg3: memref<1x64xf32, #tpu.memory_space<vmem>>, %arg4: memref<96x32xbf16, #tpu.memory_space<vmem>>, %arg5: memref<1x32xf32, #tpu.memory_space<vmem>>, %arg6: memref<96x32xbf16, #tpu.memory_space<vmem>>, %arg7: memref<1x32xf32, #tpu.memory_space<vmem>>, %arg8: memref<1x32xf32, #tpu.memory_space<vmem>>, %arg9: memref<1x32xf32, #tpu.memory_space<vmem>>, %arg10: memref<32x128xbf16, #tpu.memory_space<vmem>>, %arg11: memref<1x128xf32, #tpu.memory_space<vmem>>, %arg12: memref<1x128xf32, #tpu.memory_space<vmem>>, %arg13: memref<1x1x128xf32, #tpu.memory_space<vmem>>, %arg14: memref<16x12xf32, #tpu.memory_space<vmem>>, %arg15: memref<16x96xf32, #tpu.memory_space<vmem>>, %arg16: memref<16x96xf32, #tpu.memory_space<vmem>>) attributes {dimension_semantics = [#tpu.dimension_semantics<parallel>], iteration_bounds = array<i64: 2>, scalar_prefetch = 0 : i64, scratch_operands = 3 : i64, tpu.core_type = #tpu.core_type<tc>, window_params = [{transform_indices = @transform_0, window_bounds = array<i64: 1, 16, 4>}, {pipeline_mode = #tpu.pipeline_mode<synchronous>, transform_indices = @transform_1, window_bounds = array<i64: 12, 64>}, {pipeline_mode = #tpu.pipeline_mode<synchronous>, transform_indices = @transform_2, window_bounds = array<i64: 1, 64>}, {pipeline_mode = #tpu.pipeline_mode<synchronous>, transform_indices = @transform_3, window_bounds = array<i64: 96, 32>}, {pipeline_mode = #tpu.pipeline_mode<synchronous>, transform_indices = @transform_4, window_bounds = array<i64: 1, 32>}, {pipeline_mode = #tpu.pipeline_mode<synchronous>, transform_indices = @transform_5, window_bounds = array<i64: 96, 32>}, {pipeline_mode = #tpu.pipeline_mode<synchronous>, transform_indices = @transform_6, window_bounds = array<i64: 1, 32>}, {pipeline_mode = #tpu.pipeline_mode<synchronous>, transform_indices = @transform_7, window_bounds = array<i64: 1, 32>}, {pipeline_mode = #tpu.pipeline_mode<synchronous>, transform_indices = @transform_8, window_bounds = array<i64: 1, 32>}, {pipeline_mode = #tpu.pipeline_mode<synchronous>, transform_indices = @transform_9, window_bounds = array<i64: 32, 128>}, {pipeline_mode = #tpu.pipeline_mode<synchronous>, transform_indices = @transform_10, window_bounds = array<i64: 1, 128>}, {pipeline_mode = #tpu.pipeline_mode<synchronous>, transform_indices = @transform_11, window_bounds = array<i64: 1, 128>}, {transform_indices = @transform_12, window_bounds = array<i64: 1, 1, 128>}]} {
    %c0 = arith.constant 0 : index
    %c0_0 = arith.constant 0 : index
    %c0_1 = arith.constant 0 : index
    %0 = vector.load %arg1[%c0, %c0_0, %c0_1] : memref<1x16x4xf32, #tpu.memory_space<vmem>>, vector<1x16x4xf32>
    %1 = vector.shape_cast %0 : vector<1x16x4xf32> to vector<16x4xf32>
    %cst = arith.constant 0.000000e+00 : f32
    %2 = vector.broadcast %cst : f32 to vector<16x12xf32>
    %c0_2 = arith.constant 0 : index
    %c0_3 = arith.constant 0 : index
    %3 = vector.load %arg14[%c0_2, %c0_3] : memref<16x12xf32, #tpu.memory_space<vmem>>, vector<16x12xf32>
    tpu.vector_store %arg14[%c0_2, %c0_3], %2 {strides = array<i32>} : memref<16x12xf32, #tpu.memory_space<vmem>>, vector<16x12xf32>,
    %4 = vector.extract_strided_slice %1 {offsets = [0, 0], sizes = [14, 4], strides = [1, 1]} : vector<16x4xf32> to vector<14x4xf32>
    %c2 = arith.constant 2 : index
    %c0_4 = arith.constant 0 : index
    %5 = vector.load %arg14[%c2, %c0_4] : memref<16x12xf32, #tpu.memory_space<vmem>>, vector<14x4xf32>
    tpu.vector_store %arg14[%c2, %c0_4], %4 {strides = array<i32>} : memref<16x12xf32, #tpu.memory_space<vmem>>, vector<14x4xf32>,
    %6 = vector.extract_strided_slice %1 {offsets = [0, 0], sizes = [15, 4], strides = [1, 1]} : vector<16x4xf32> to vector<15x4xf32>
    %c1 = arith.constant 1 : index
    %c4 = arith.constant 4 : index
    %7 = vector.load %arg14[%c1, %c4] : memref<16x12xf32, #tpu.memory_space<vmem>>, vector<15x4xf32>
    tpu.vector_store %arg14[%c1, %c4], %6 {strides = array<i32>} : memref<16x12xf32, #tpu.memory_space<vmem>>, vector<15x4xf32>,
    %c0_5 = arith.constant 0 : index
    %c8 = arith.constant 8 : index
    %8 = vector.load %arg14[%c0_5, %c8] : memref<16x12xf32, #tpu.memory_space<vmem>>, vector<16x4xf32>
    tpu.vector_store %arg14[%c0_5, %c8], %1 {strides = array<i32>} : memref<16x12xf32, #tpu.memory_space<vmem>>, vector<16x4xf32>,
    %c0_6 = arith.constant 0 : index
    %c0_7 = arith.constant 0 : index
    %9 = vector.load %arg14[%c0_6, %c0_7] : memref<16x12xf32, #tpu.memory_space<vmem>>, vector<16x12xf32>
    %10 = arith.truncf %9 : vector<16x12xf32> to vector<16x12xbf16>
    %c0_8 = arith.constant 0 : index
    %c0_9 = arith.constant 0 : index
    %11 = vector.load %arg2[%c0_8, %c0_9] : memref<12x64xbf16, #tpu.memory_space<vmem>>, vector<12x64xbf16>
    %cst_10 = arith.constant dense<0.000000e+00> : vector<16x64xf32>
    %12 = tpu.matmul %10, %11, %cst_10 {dimension_numbers = #tpu.dot_dimension_numbers<[1], [0], [0], [1], [0, 0, 1, 1], [], []>} : vector<16x12xbf16>, vector<12x64xbf16>, vector<16x64xf32> -> vector<16x64xf32>
    %c0_11 = arith.constant 0 : index
    %c0_12 = arith.constant 0 : index
    %13 = vector.load %arg3[%c0_11, %c0_12] : memref<1x64xf32, #tpu.memory_space<vmem>>, vector<1x64xf32>
    %14 = vector.broadcast %13 : vector<1x64xf32> to vector<16x64xf32>
    %15 = arith.addf %12, %14 : vector<16x64xf32>
    %16 = vector.extract_strided_slice %15 {offsets = [0, 0], sizes = [16, 32], strides = [1, 1]} : vector<16x64xf32> to vector<16x32xf32>
    %cst_13 = arith.constant 5.000000e-01 : f32
    %17 = vector.broadcast %cst_13 : f32 to vector<16x32xf32>
    %18 = arith.mulf %17, %16 : vector<16x32xf32>
    %cst_14 = arith.constant 0.707106769 : f32
    %19 = vector.broadcast %cst_14 : f32 to vector<16x32xf32>
    %20 = arith.mulf %16, %19 : vector<16x32xf32>
    %21 = math.erf %20 : vector<16x32xf32>
    %cst_15 = arith.constant 1.000000e+00 : f32
    %22 = vector.broadcast %cst_15 : f32 to vector<16x32xf32>
    %23 = arith.addf %22, %21 : vector<16x32xf32>
    %24 = arith.mulf %18, %23 : vector<16x32xf32>
    %25 = vector.extract_strided_slice %15 {offsets = [0, 32], sizes = [16, 32], strides = [1, 1]} : vector<16x64xf32> to vector<16x32xf32>
    %26 = arith.addf %24, %25 : vector<16x32xf32>
    %cst_16 = arith.constant 0.000000e+00 : f32
    %27 = vector.broadcast %cst_16 : f32 to vector<16x96xf32>
    %c0_17 = arith.constant 0 : index
    %c0_18 = arith.constant 0 : index
    %28 = vector.load %arg15[%c0_17, %c0_18] : memref<16x96xf32, #tpu.memory_space<vmem>>, vector<16x96xf32>
    tpu.vector_store %arg15[%c0_17, %c0_18], %27 {strides = array<i32>} : memref<16x96xf32, #tpu.memory_space<vmem>>, vector<16x96xf32>,
    %29 = vector.extract_strided_slice %26 {offsets = [0, 0], sizes = [12, 32], strides = [1, 1]} : vector<16x32xf32> to vector<12x32xf32>
    %c4_19 = arith.constant 4 : index
    %c0_20 = arith.constant 0 : index
    %30 = vector.load %arg15[%c4_19, %c0_20] : memref<16x96xf32, #tpu.memory_space<vmem>>, vector<12x32xf32>
    tpu.vector_store %arg15[%c4_19, %c0_20], %29 {strides = array<i32>} : memref<16x96xf32, #tpu.memory_space<vmem>>, vector<12x32xf32>,
    %31 = vector.extract_strided_slice %26 {offsets = [0, 0], sizes = [14, 32], strides = [1, 1]} : vector<16x32xf32> to vector<14x32xf32>
    %c2_21 = arith.constant 2 : index
    %c32 = arith.constant 32 : index
    %32 = vector.load %arg15[%c2_21, %c32] : memref<16x96xf32, #tpu.memory_space<vmem>>, vector<14x32xf32>
    tpu.vector_store %arg15[%c2_21, %c32], %31 {strides = array<i32>} : memref<16x96xf32, #tpu.memory_space<vmem>>, vector<14x32xf32>,
    %c0_22 = arith.constant 0 : index
    %c64 = arith.constant 64 : index
    %33 = vector.load %arg15[%c0_22, %c64] : memref<16x96xf32, #tpu.memory_space<vmem>>, vector<16x32xf32>
    tpu.vector_store %arg15[%c0_22, %c64], %26 {strides = array<i32>} : memref<16x96xf32, #tpu.memory_space<vmem>>, vector<16x32xf32>,
    %c0_23 = arith.constant 0 : index
    %c0_24 = arith.constant 0 : index
    %34 = vector.load %arg15[%c0_23, %c0_24] : memref<16x96xf32, #tpu.memory_space<vmem>>, vector<16x96xf32>
    %35 = arith.truncf %34 : vector<16x96xf32> to vector<16x96xbf16>
    %c0_25 = arith.constant 0 : index
    %c0_26 = arith.constant 0 : index
    %36 = vector.load %arg4[%c0_25, %c0_26] : memref<96x32xbf16, #tpu.memory_space<vmem>>, vector<96x32xbf16>
    %cst_27 = arith.constant dense<0.000000e+00> : vector<16x32xf32>
    %37 = tpu.matmul %35, %36, %cst_27 {dimension_numbers = #tpu.dot_dimension_numbers<[1], [0], [0], [1], [0, 0, 1, 1], [], []>} : vector<16x96xbf16>, vector<96x32xbf16>, vector<16x32xf32> -> vector<16x32xf32>
    %c0_28 = arith.constant 0 : index
    %c0_29 = arith.constant 0 : index
    %38 = vector.load %arg5[%c0_28, %c0_29] : memref<1x32xf32, #tpu.memory_space<vmem>>, vector<1x32xf32>
    %39 = vector.broadcast %38 : vector<1x32xf32> to vector<16x32xf32>
    %40 = arith.addf %37, %39 : vector<16x32xf32>
    %cst_30 = arith.constant 5.000000e-01 : f32
    %41 = vector.broadcast %cst_30 : f32 to vector<16x32xf32>
    %42 = arith.mulf %41, %40 : vector<16x32xf32>
    %cst_31 = arith.constant 0.707106769 : f32
    %43 = vector.broadcast %cst_31 : f32 to vector<16x32xf32>
    %44 = arith.mulf %40, %43 : vector<16x32xf32>
    %45 = math.erf %44 : vector<16x32xf32>
    %cst_32 = arith.constant 1.000000e+00 : f32
    %46 = vector.broadcast %cst_32 : f32 to vector<16x32xf32>
    %47 = arith.addf %46, %45 : vector<16x32xf32>
    %48 = arith.mulf %42, %47 : vector<16x32xf32>
    %49 = arith.addf %48, %26 : vector<16x32xf32>
    %cst_33 = arith.constant 0.000000e+00 : f32
    %50 = vector.broadcast %cst_33 : f32 to vector<16x96xf32>
    %c0_34 = arith.constant 0 : index
    %c0_35 = arith.constant 0 : index
    %51 = vector.load %arg16[%c0_34, %c0_35] : memref<16x96xf32, #tpu.memory_space<vmem>>, vector<16x96xf32>
    tpu.vector_store %arg16[%c0_34, %c0_35], %50 {strides = array<i32>} : memref<16x96xf32, #tpu.memory_space<vmem>>, vector<16x96xf32>,
    %52 = vector.extract_strided_slice %49 {offsets = [0, 0], sizes = [8, 32], strides = [1, 1]} : vector<16x32xf32> to vector<8x32xf32>
    %c8_36 = arith.constant 8 : index
    %c0_37 = arith.constant 0 : index
    %53 = vector.load %arg16[%c8_36, %c0_37] : memref<16x96xf32, #tpu.memory_space<vmem>>, vector<8x32xf32>
    tpu.vector_store %arg16[%c8_36, %c0_37], %52 {strides = array<i32>} : memref<16x96xf32, #tpu.memory_space<vmem>>, vector<8x32xf32>,
    %54 = vector.extract_strided_slice %49 {offsets = [0, 0], sizes = [12, 32], strides = [1, 1]} : vector<16x32xf32> to vector<12x32xf32>
    %c4_38 = arith.constant 4 : index
    %c32_39 = arith.constant 32 : index
    %55 = vector.load %arg16[%c4_38, %c32_39] : memref<16x96xf32, #tpu.memory_space<vmem>>, vector<12x32xf32>
    tpu.vector_store %arg16[%c4_38, %c32_39], %54 {strides = array<i32>} : memref<16x96xf32, #tpu.memory_space<vmem>>, vector<12x32xf32>,
    %c0_40 = arith.constant 0 : index
    %c64_41 = arith.constant 64 : index
    %56 = vector.load %arg16[%c0_40, %c64_41] : memref<16x96xf32, #tpu.memory_space<vmem>>, vector<16x32xf32>
    tpu.vector_store %arg16[%c0_40, %c64_41], %49 {strides = array<i32>} : memref<16x96xf32, #tpu.memory_space<vmem>>, vector<16x32xf32>,
    %c0_42 = arith.constant 0 : index
    %c0_43 = arith.constant 0 : index
    %57 = vector.load %arg16[%c0_42, %c0_43] : memref<16x96xf32, #tpu.memory_space<vmem>>, vector<16x96xf32>
    %58 = arith.truncf %57 : vector<16x96xf32> to vector<16x96xbf16>
    %c0_44 = arith.constant 0 : index
    %c0_45 = arith.constant 0 : index
    %59 = vector.load %arg6[%c0_44, %c0_45] : memref<96x32xbf16, #tpu.memory_space<vmem>>, vector<96x32xbf16>
    %cst_46 = arith.constant dense<0.000000e+00> : vector<16x32xf32>
    %60 = tpu.matmul %58, %59, %cst_46 {dimension_numbers = #tpu.dot_dimension_numbers<[1], [0], [0], [1], [0, 0, 1, 1], [], []>} : vector<16x96xbf16>, vector<96x32xbf16>, vector<16x32xf32> -> vector<16x32xf32>
    %c0_47 = arith.constant 0 : index
    %c0_48 = arith.constant 0 : index
    %61 = vector.load %arg7[%c0_47, %c0_48] : memref<1x32xf32, #tpu.memory_space<vmem>>, vector<1x32xf32>
    %62 = vector.broadcast %61 : vector<1x32xf32> to vector<16x32xf32>
    %63 = arith.addf %60, %62 : vector<16x32xf32>
    %cst_49 = arith.constant 5.000000e-01 : f32
    %64 = vector.broadcast %cst_49 : f32 to vector<16x32xf32>
    %65 = arith.mulf %64, %63 : vector<16x32xf32>
    %cst_50 = arith.constant 0.707106769 : f32
    %66 = vector.broadcast %cst_50 : f32 to vector<16x32xf32>
    %67 = arith.mulf %63, %66 : vector<16x32xf32>
    %68 = math.erf %67 : vector<16x32xf32>
    %cst_51 = arith.constant 1.000000e+00 : f32
    %69 = vector.broadcast %cst_51 : f32 to vector<16x32xf32>
    %70 = arith.addf %69, %68 : vector<16x32xf32>
    %71 = arith.mulf %65, %70 : vector<16x32xf32>
    %72 = arith.addf %71, %49 : vector<16x32xf32>
    %73 = vector.extract_strided_slice %72 {offsets = [15, 0], sizes = [1, 32], strides = [1, 1]} : vector<16x32xf32> to vector<1x32xf32>
    %cst_52 = arith.constant dense<0.000000e+00> : vector<1xf32>
    %74 = vector.multi_reduction <add>, %73, %cst_52 [1] : vector<1x32xf32> to vector<1xf32>
    %75 = vector.shape_cast %74 : vector<1xf32> to vector<1x1xf32>
    %cst_53 = arith.constant 3.200000e+01 : f32
    %76 = vector.broadcast %cst_53 : f32 to vector<1x1xf32>
    %77 = arith.divf %75, %76 : vector<1x1xf32>
    %78 = vector.broadcast %77 : vector<1x1xf32> to vector<1x32xf32>
    %79 = arith.subf %73, %78 : vector<1x32xf32>
    %80 = arith.mulf %79, %79 : vector<1x32xf32>
    %cst_54 = arith.constant dense<0.000000e+00> : vector<1xf32>
    %81 = vector.multi_reduction <add>, %80, %cst_54 [1] : vector<1x32xf32> to vector<1xf32>
    %82 = vector.shape_cast %81 : vector<1xf32> to vector<1x1xf32>
    %cst_55 = arith.constant 3.200000e+01 : f32
    %83 = vector.broadcast %cst_55 : f32 to vector<1x1xf32>
    %84 = arith.divf %82, %83 : vector<1x1xf32>
    %85 = vector.broadcast %77 : vector<1x1xf32> to vector<1x32xf32>
    %86 = arith.subf %73, %85 : vector<1x32xf32>
    %cst_56 = arith.constant 9.99999974E-6 : f32
    %87 = vector.broadcast %cst_56 : f32 to vector<1x1xf32>
    %88 = arith.addf %84, %87 : vector<1x1xf32>
    %89 = math.rsqrt %88 : vector<1x1xf32>
    %90 = vector.broadcast %89 : vector<1x1xf32> to vector<1x32xf32>
    %91 = arith.mulf %86, %90 : vector<1x32xf32>
    %c0_57 = arith.constant 0 : index
    %c0_58 = arith.constant 0 : index
    %92 = vector.load %arg8[%c0_57, %c0_58] : memref<1x32xf32, #tpu.memory_space<vmem>>, vector<1x32xf32>
    %93 = arith.mulf %91, %92 : vector<1x32xf32>
    %c0_59 = arith.constant 0 : index
    %c0_60 = arith.constant 0 : index
    %94 = vector.load %arg9[%c0_59, %c0_60] : memref<1x32xf32, #tpu.memory_space<vmem>>, vector<1x32xf32>
    %95 = arith.addf %93, %94 : vector<1x32xf32>
    %96 = arith.truncf %95 : vector<1x32xf32> to vector<1x32xbf16>
    %c0_61 = arith.constant 0 : index
    %c0_62 = arith.constant 0 : index
    %97 = vector.load %arg10[%c0_61, %c0_62] : memref<32x128xbf16, #tpu.memory_space<vmem>>, vector<32x128xbf16>
    %cst_63 = arith.constant dense<0.000000e+00> : vector<1x128xf32>
    %98 = tpu.matmul %96, %97, %cst_63 {dimension_numbers = #tpu.dot_dimension_numbers<[1], [0], [0], [1], [0, 0, 1, 1], [], []>} : vector<1x32xbf16>, vector<32x128xbf16>, vector<1x128xf32> -> vector<1x128xf32>
    %c0_64 = arith.constant 0 : index
    %c0_65 = arith.constant 0 : index
    %99 = vector.load %arg11[%c0_64, %c0_65] : memref<1x128xf32, #tpu.memory_space<vmem>>, vector<1x128xf32>
    %100 = arith.addf %98, %99 : vector<1x128xf32>
    %c0_66 = arith.constant 0 : index
    %c0_67 = arith.constant 0 : index
    %101 = vector.load %arg12[%c0_66, %c0_67] : memref<1x128xf32, #tpu.memory_space<vmem>>, vector<1x128xf32>
    %cst_68 = arith.constant 0.000000e+00 : f32
    %102 = vector.broadcast %cst_68 : f32 to vector<1x128xf32>
    %103 = arith.maximumf %100, %102 : vector<1x128xf32>
    %104 = vector.broadcast %cst_68 : f32 to vector<1x128xf32>
    %105 = arith.subf %100, %104 : vector<1x128xf32>
    %106 = arith.cmpf one, %105, %105 : vector<1x128xf32>
    %107 = vector.broadcast %cst_68 : f32 to vector<1x128xf32>
    %108 = arith.addf %100, %107 : vector<1x128xf32>
    %109 = math.absf %105 : vector<1x128xf32>
    %cst_69 = arith.constant 0.000000e+00 : f32
    %110 = vector.broadcast %cst_69 : f32 to vector<1x128xf32>
    %111 = arith.subf %110, %109 : vector<1x128xf32>
    %112 = math.exp %111 : vector<1x128xf32>
    %113 = math.log1p %112 : vector<1x128xf32>
    %114 = arith.addf %103, %113 : vector<1x128xf32>
    %115 = arith.select %106, %108, %114 : vector<1x128xi1>, vector<1x128xf32>
    %cst_70 = arith.constant 9.99999997E-7 : f32
    %116 = vector.broadcast %cst_70 : f32 to vector<1x128xf32>
    %117 = arith.addf %115, %116 : vector<1x128xf32>
    %118 = arith.subf %117, %100 : vector<1x128xf32>
    %119 = arith.mulf %101, %118 : vector<1x128xf32>
    %120 = arith.addf %100, %119 : vector<1x128xf32>
    %c0_71 = arith.constant 0 : index
    %c0_72 = arith.constant 0 : index
    %c0_73 = arith.constant 0 : index
    %121 = vector.load %arg13[%c0_71, %c0_72, %c0_73] : memref<1x1x128xf32, #tpu.memory_space<vmem>>, vector<1x1x128xf32>
    %122 = vector.shape_cast %121 : vector<1x1x128xf32> to vector<1x128xf32>
    %123 = vector.shape_cast %120 : vector<1x128xf32> to vector<1x1x128xf32>
    tpu.vector_store %arg13[%c0_71, %c0_72, %c0_73], %123 {strides = array<i32>} : memref<1x1x128xf32, #tpu.memory_space<vmem>>, vector<1x1x128xf32>,
    return
  }
  func.func @transform_0(%arg0: i32) -> (i32, i32, i32) {
    %c0_i32 = arith.constant 0 : i32
    %c0_i32_0 = arith.constant 0 : i32
    %c0_i32_1 = arith.constant 0 : i32
    return %arg0, %c0_i32, %c0_i32_0 : i32, i32, i32
  }
  func.func @transform_1(%arg0: i32) -> (i32, i32) {
    %c0_i32 = arith.constant 0 : i32
    %c0_i32_0 = arith.constant 0 : i32
    %c0_i32_1 = arith.constant 0 : i32
    return %c0_i32, %c0_i32_0 : i32, i32
  }
  func.func @transform_2(%arg0: i32) -> (i32, i32) {
    %c0_i32 = arith.constant 0 : i32
    %c0_i32_0 = arith.constant 0 : i32
    %c0_i32_1 = arith.constant 0 : i32
    return %c0_i32, %c0_i32_0 : i32, i32
  }
  func.func @transform_3(%arg0: i32) -> (i32, i32) {
    %c0_i32 = arith.constant 0 : i32
    %c0_i32_0 = arith.constant 0 : i32
    %c0_i32_1 = arith.constant 0 : i32
    return %c0_i32, %c0_i32_0 : i32, i32
  }
  func.func @transform_4(%arg0: i32) -> (i32, i32) {
    %c0_i32 = arith.constant 0 : i32
    %c0_i32_0 = arith.constant 0 : i32
    %c0_i32_1 = arith.constant 0 : i32
    return %c0_i32, %c0_i32_0 : i32, i32
  }
  func.func @transform_5(%arg0: i32) -> (i32, i32) {
    %c0_i32 = arith.constant 0 : i32
    %c0_i32_0 = arith.constant 0 : i32
    %c0_i32_1 = arith.constant 0 : i32
    return %c0_i32, %c0_i32_0 : i32, i32
  }
  func.func @transform_6(%arg0: i32) -> (i32, i32) {
    %c0_i32 = arith.constant 0 : i32
    %c0_i32_0 = arith.constant 0 : i32
    %c0_i32_1 = arith.constant 0 : i32
    return %c0_i32, %c0_i32_0 : i32, i32
  }
  func.func @transform_7(%arg0: i32) -> (i32, i32) {
    %c0_i32 = arith.constant 0 : i32
    %c0_i32_0 = arith.constant 0 : i32
    %c0_i32_1 = arith.constant 0 : i32
    return %c0_i32, %c0_i32_0 : i32, i32
  }
  func.func @transform_8(%arg0: i32) -> (i32, i32) {
    %c0_i32 = arith.constant 0 : i32
    %c0_i32_0 = arith.constant 0 : i32
    %c0_i32_1 = arith.constant 0 : i32
    return %c0_i32, %c0_i32_0 : i32, i32
  }
  func.func @transform_9(%arg0: i32) -> (i32, i32) {
    %c0_i32 = arith.constant 0 : i32
    %c0_i32_0 = arith.constant 0 : i32
    %c0_i32_1 = arith.constant 0 : i32
    return %c0_i32, %c0_i32_0 : i32, i32
  }
  func.func @transform_10(%arg0: i32) -> (i32, i32) {
    %c0_i32 = arith.constant 0 : i32
    %c0_i32_0 = arith.constant 0 : i32
    %c0_i32_1 = arith.constant 0 : i32
    return %c0_i32, %c0_i32_0 : i32, i32
  }
  func.func @transform_11(%arg0: i32) -> (i32, i32) {
    %c0_i32 = arith.constant 0 : i32
    %c0_i32_0 = arith.constant 0 : i32
    %c0_i32_1 = arith.constant 0 : i32
    return %c0_i32, %c0_i32_0 : i32, i32
  }
  func.func @transform_12(%arg0: i32) -> (i32, i32, i32) {
    %c0_i32 = arith.constant 0 : i32
    %c0_i32_0 = arith.constant 0 : i32
    %c0_i32_1 = arith.constant 0 : i32
    return %arg0, %c0_i32, %c0_i32_0 : i32, i32, i32
  }
}

</mosaic_0001>

<llo_original>
// kernel: tpu_custom_call.1
$region0: #{tpu_custom_call.1}
  #allocation0 [shape = 'u32[]', space=smem, size = 0x4, offset = 0x4, fixed_abs, tag = 'smem constant byte address 0x4 - core index']
  #allocation1 [shape = 'u32[144,128]{1,0:T(1,128)}', space=vmem, size = 0x12000, scoped, tag = 'internal scratch']
  #allocation2 [shape = 'f32[16,12]{1,0:T(8,128)}', space=vmem, size = 0x2000, scoped, tag = 'scratch operand']
  #allocation3 [shape = 'f32[16,96]{1,0:T(8,128)}', space=vmem, size = 0x2000, scoped, tag = 'scratch operand']
  #allocation4 [shape = 'f32[16,96]{1,0:T(8,128)}', space=vmem, size = 0x2000, scoped, tag = 'scratch operand']
  %s0 = inlined_call_operand.vmem [shape: f32[2,16,4], index: 0, kind: input, shape index: {}]
  %s1 = inlined_call_operand.vmem [shape: bf16[12,64], index: 1, kind: input, shape index: {}]
  %s2 = inlined_call_operand.vmem [shape: f32[1,64], index: 2, kind: input, shape index: {}]
  %s3 = inlined_call_operand.vmem [shape: bf16[96,32], index: 3, kind: input, shape index: {}]
  %s4 = inlined_call_operand.vmem [shape: f32[1,32], index: 4, kind: input, shape index: {}]
  %s5 = inlined_call_operand.vmem [shape: bf16[96,32], index: 5, kind: input, shape index: {}]
  %s6 = inlined_call_operand.vmem [shape: f32[1,32], index: 6, kind: input, shape index: {}]
  %s7 = inlined_call_operand.vmem [shape: f32[1,32], index: 7, kind: input, shape index: {}]
  %s8 = inlined_call_operand.vmem [shape: f32[1,32], index: 8, kind: input, shape index: {}]
  %s9 = inlined_call_operand.vmem [shape: bf16[32,128], index: 9, kind: input, shape index: {}]
  %s10 = inlined_call_operand.vmem [shape: f32[1,128], index: 10, kind: input, shape index: {}]
  %s11 = inlined_call_operand.vmem [shape: f32[1,128], index: 11, kind: input, shape index: {}]
  %s12 = inlined_call_operand.hbm [shape: f32[2,1,128], index: 12, kind: output, shape index: {}]
  %s13 = sld [smem:[#allocation0]]
  $region81: #{tpu_custom_call.1} parent=0
    _
  %s15 = ssub.s32 1, %s13
  %s16 = scalar_select 0, %s15, %s13
  $region1: #{tpu_custom_call.1} parent=0
    #allocation5 [shape = 'u8[1024]{0}', space=vmem, size = 0x400, scoped, tag = 'output window, operand 0']
    #allocation6 [shape = 's32[2]{0}', space=sflag, size = 0x8, scoped, tag = 'scoped memory for tpu_custom_call.1']
    %17 = vsyncpa [#allocation6], 0
    %s18 = scalar_lea.sflag [#allocation6], 1
    %19 = vsyncpa %s18, 0
    loop: start=0, step=1, limit=4
    $region2: #{tpu_custom_call.1} parent=1 // loop_pre_header
      _
    $region3: #{tpu_custom_call.1} parent=1 // loop_header
      %s21 = sphi 0, %s25
      %p22 = scmp.ge.s32.totalorder %s21, 4
      %s31 = sphi 0, %s33
      %s34 = sphi 0, %s31
      %s35 = sphi 0, %s34
      %s51 = sphi 0, %s35
      %s55 = sphi 0, %s55
      %s57 = sphi 0, %s55
      %s58 = sphi 0, %s57
      %s72 = sphi 0, %s58
      %s76 = sphi 0, %s76
      %s78 = sphi 0, %s76
      %s79 = sphi 0, %s78
      %s93 = sphi 0, %s79
      %s97 = sphi 0, %s97
      %s99 = sphi 0, %s97
      %s100 = sphi 0, %s99
      %s114 = sphi 0, %s100
      %s118 = sphi 0, %s118
      %s120 = sphi 0, %s118
      %s121 = sphi 0, %s120
      %s135 = sphi 0, %s121
      %s139 = sphi 0, %s139
      %s141 = sphi 0, %s139
      %s142 = sphi 0, %s141
      %s156 = sphi 0, %s142
      %s160 = sphi 0, %s160
      %s162 = sphi 0, %s160
      %s163 = sphi 0, %s162
      %s177 = sphi 0, %s163
      %s181 = sphi 0, %s181
      %s183 = sphi 0, %s181
      %s184 = sphi 0, %s183
      %s198 = sphi 0, %s184
      %s202 = sphi 0, %s202
      %s204 = sphi 0, %s202
      %s205 = sphi 0, %s204
      %s219 = sphi 0, %s205
      %s223 = sphi 0, %s223
      %s225 = sphi 0, %s223
      %s226 = sphi 0, %s225
      %s240 = sphi 0, %s226
      %s244 = sphi 0, %s244
      %s246 = sphi 0, %s244
      %s247 = sphi 0, %s246
      %s261 = sphi 0, %s247
      %s265 = sphi 0, %s265
      %s267 = sphi 0, %s265
      %s268 = sphi 0, %s267
      %s282 = sphi 0, %s268
      %s288 = sphi 0, %s290
      %s291 = sphi 0, %s288
      %s292 = sphi 0, %s291
      %s308 = sphi 0, %s292
    $region4: #{tpu_custom_call.1} parent=1 // loop_header_branch
      %24 = sbr.rel (%p22) target = $region8
    $region5: #{tpu_custom_call.1} parent=1 // loop_body
      %s26 = ssub.s32 %s21, 1
      %s27 = ssub.s32 %s21, 2
      %s28 = sadd.s32 %s21, 1
      %s29 = ssub.s32 %s21, %s28
      %p30 = scmp.eq.s32.totalorder %s29, 0
      %s32 = sadd.s32 %s31, 1
      %s33 = scalar_select %p30, %s31, %s32
      %p36 = pneg %p30
      %p37 = scmp.eq.s32.totalorder %s21, 1
      %p38 = por %p36, %p37
      %p39 = scmp.ne.s32.totalorder %s31, %s34
      %p40 = scmp.eq.s32.totalorder %s21, 0
      %p41 = por %p39, %p40
      %p42 = scmp.ne.s32.totalorder %s31, %s34
      %p43 = scmp.eq.s32.totalorder %s26, 1
      %p44 = por %p42, %p43
      %p45 = scmp.ne.s32.totalorder %s34, %s35
      %p46 = scmp.eq.s32.totalorder %s26, 0
      %p47 = por %p45, %p46
      %p48 = scmp.ne.s32.totalorder %s34, %s35
      %p49 = scmp.eq.s32.totalorder %s27, 1
      %p50 = por %p48, %p49
      %p52 = scmp.ne.s32.totalorder %s35, %s51
      %p53 = scmp.eq.s32.totalorder %s27, 0
      %p54 = por %p52, %p53
      %s56 = sadd.s32 %s55, 1
      %p59 = scmp.eq.s32.totalorder %s21, 1
      %p60 = scmp.ne.s32.totalorder %s55, %s57
      %p61 = scmp.eq.s32.totalorder %s21, 0
      %p62 = por %p60, %p61
      %p63 = scmp.ne.s32.totalorder %s55, %s57
      %p64 = scmp.eq.s32.totalorder %s26, 1
      %p65 = por %p63, %p64
      %p66 = scmp.ne.s32.totalorder %s57, %s58
      %p67 = scmp.eq.s32.totalorder %s26, 0
      %p68 = por %p66, %p67
      %p69 = scmp.ne.s32.totalorder %s57, %s58
      %p70 = scmp.eq.s32.totalorder %s27, 1
      %p71 = por %p69, %p70
      %p73 = scmp.ne.s32.totalorder %s58, %s72
      %p74 = scmp.eq.s32.totalorder %s27, 0
      %p75 = por %p73, %p74
      %s77 = sadd.s32 %s76, 1
      %p80 = scmp.eq.s32.totalorder %s21, 1
      %p81 = scmp.ne.s32.totalorder %s76, %s78
      %p82 = scmp.eq.s32.totalorder %s21, 0
      %p83 = por %p81, %p82
      %p84 = scmp.ne.s32.totalorder %s76, %s78
      %p85 = scmp.eq.s32.totalorder %s26, 1
      %p86 = por %p84, %p85
      %p87 = scmp.ne.s32.totalorder %s78, %s79
      %p88 = scmp.eq.s32.totalorder %s26, 0
      %p89 = por %p87, %p88
      %p90 = scmp.ne.s32.totalorder %s78, %s79
      %p91 = scmp.eq.s32.totalorder %s27, 1
      %p92 = por %p90, %p91
      %p94 = scmp.ne.s32.totalorder %s79, %s93
      %p95 = scmp.eq.s32.totalorder %s27, 0
      %p96 = por %p94, %p95
      %s98 = sadd.s32 %s97, 1
      %p101 = scmp.eq.s32.totalorder %s21, 1
      %p102 = scmp.ne.s32.totalorder %s97, %s99
      %p103 = scmp.eq.s32.totalorder %s21, 0
      %p104 = por %p102, %p103
      %p105 = scmp.ne.s32.totalorder %s97, %s99
      %p106 = scmp.eq.s32.totalorder %s26, 1
      %p107 = por %p105, %p106
      %p108 = scmp.ne.s32.totalorder %s99, %s100
      %p109 = scmp.eq.s32.totalorder %s26, 0
      %p110 = por %p108, %p109
      %p111 = scmp.ne.s32.totalorder %s99, %s100
      %p112 = scmp.eq.s32.totalorder %s27, 1
      %p113 = por %p111, %p112
      %p115 = scmp.ne.s32.totalorder %s100, %s114
      %p116 = scmp.eq.s32.totalorder %s27, 0
      %p117 = por %p115, %p116
      %s119 = sadd.s32 %s118, 1
      %p122 = scmp.eq.s32.totalorder %s21, 1
      %p123 = scmp.ne.s32.totalorder %s118, %s120
      %p124 = scmp.eq.s32.totalorder %s21, 0
      %p125 = por %p123, %p124
      %p126 = scmp.ne.s32.totalorder %s118, %s120
      %p127 = scmp.eq.s32.totalorder %s26, 1
      %p128 = por %p126, %p127
      %p129 = scmp.ne.s32.totalorder %s120, %s121
      %p130 = scmp.eq.s32.totalorder %s26, 0
      %p131 = por %p129, %p130
      %p132 = scmp.ne.s32.totalorder %s120, %s121
      %p133 = scmp.eq.s32.totalorder %s27, 1
      %p134 = por %p132, %p133
      %p136 = scmp.ne.s32.totalorder %s121, %s135
      %p137 = scmp.eq.s32.totalorder %s27, 0
      %p138 = por %p136, %p137
      %s140 = sadd.s32 %s139, 1
      %p143 = scmp.eq.s32.totalorder %s21, 1
      %p144 = scmp.ne.s32.totalorder %s139, %s141
      %p145 = scmp.eq.s32.totalorder %s21, 0
      %p146 = por %p144, %p145
      %p147 = scmp.ne.s32.totalorder %s139, %s141
      %p148 = scmp.eq.s32.totalorder %s26, 1
      %p149 = por %p147, %p148
      %p150 = scmp.ne.s32.totalorder %s141, %s142
      %p151 = scmp.eq.s32.totalorder %s26, 0
      %p152 = por %p150, %p151
      %p153 = scmp.ne.s32.totalorder %s141, %s142
      %p154 = scmp.eq.s32.totalorder %s27, 1
      %p155 = por %p153, %p154
      %p157 = scmp.ne.s32.totalorder %s142, %s156
      %p158 = scmp.eq.s32.totalorder %s27, 0
      %p159 = por %p157, %p158
      %s161 = sadd.s32 %s160, 1
      %p164 = scmp.eq.s32.totalorder %s21, 1
      %p165 = scmp.ne.s32.totalorder %s160, %s162
      %p166 = scmp.eq.s32.totalorder %s21, 0
      %p167 = por %p165, %p166
      %p168 = scmp.ne.s32.totalorder %s160, %s162
      %p169 = scmp.eq.s32.totalorder %s26, 1
      %p170 = por %p168, %p169
      %p171 = scmp.ne.s32.totalorder %s162, %s163
      %p172 = scmp.eq.s32.totalorder %s26, 0
      %p173 = por %p171, %p172
      %p174 = scmp.ne.s32.totalorder %s162, %s163
      %p175 = scmp.eq.s32.totalorder %s27, 1
      %p176 = por %p174, %p175
      %p178 = scmp.ne.s32.totalorder %s163, %s177
      %p179 = scmp.eq.s32.totalorder %s27, 0
      %p180 = por %p178, %p179
      %s182 = sadd.s32 %s181, 1
      %p185 = scmp.eq.s32.totalorder %s21, 1
      %p186 = scmp.ne.s32.totalorder %s181, %s183
      %p187 = scmp.eq.s32.totalorder %s21, 0
      %p188 = por %p186, %p187
      %p189 = scmp.ne.s32.totalorder %s181, %s183
      %p190 = scmp.eq.s32.totalorder %s26, 1
      %p191 = por %p189, %p190
      %p192 = scmp.ne.s32.totalorder %s183, %s184
      %p193 = scmp.eq.s32.totalorder %s26, 0
      %p194 = por %p192, %p193
      %p195 = scmp.ne.s32.totalorder %s183, %s184
      %p196 = scmp.eq.s32.totalorder %s27, 1
      %p197 = por %p195, %p196
      %p199 = scmp.ne.s32.totalorder %s184, %s198
      %p200 = scmp.eq.s32.totalorder %s27, 0
      %p201 = por %p199, %p200
      %s203 = sadd.s32 %s202, 1
      %p206 = scmp.eq.s32.totalorder %s21, 1
      %p207 = scmp.ne.s32.totalorder %s202, %s204
      %p208 = scmp.eq.s32.totalorder %s21, 0
      %p209 = por %p207, %p208
      %p210 = scmp.ne.s32.totalorder %s202, %s204
      %p211 = scmp.eq.s32.totalorder %s26, 1
      %p212 = por %p210, %p211
      %p213 = scmp.ne.s32.totalorder %s204, %s205
      %p214 = scmp.eq.s32.totalorder %s26, 0
      %p215 = por %p213, %p214
      %p216 = scmp.ne.s32.totalorder %s204, %s205
      %p217 = scmp.eq.s32.totalorder %s27, 1
      %p218 = por %p216, %p217
      %p220 = scmp.ne.s32.totalorder %s205, %s219
      %p221 = scmp.eq.s32.totalorder %s27, 0
      %p222 = por %p220, %p221
      %s224 = sadd.s32 %s223, 1
      %p227 = scmp.eq.s32.totalorder %s21, 1
      %p228 = scmp.ne.s32.totalorder %s223, %s225
      %p229 = scmp.eq.s32.totalorder %s21, 0
      %p230 = por %p228, %p229
      %p231 = scmp.ne.s32.totalorder %s223, %s225
      %p232 = scmp.eq.s32.totalorder %s26, 1
      %p233 = por %p231, %p232
      %p234 = scmp.ne.s32.totalorder %s225, %s226
      %p235 = scmp.eq.s32.totalorder %s26, 0
      %p236 = por %p234, %p235
      %p237 = scmp.ne.s32.totalorder %s225, %s226
      %p238 = scmp.eq.s32.totalorder %s27, 1
      %p239 = por %p237, %p238
      %p241 = scmp.ne.s32.totalorder %s226, %s240
      %p242 = scmp.eq.s32.totalorder %s27, 0
      %p243 = por %p241, %p242
      %s245 = sadd.s32 %s244, 1
      %p248 = scmp.eq.s32.totalorder %s21, 1
      %p249 = scmp.ne.s32.totalorder %s244, %s246
      %p250 = scmp.eq.s32.totalorder %s21, 0
      %p251 = por %p249, %p250
      %p252 = scmp.ne.s32.totalorder %s244, %s246
      %p253 = scmp.eq.s32.totalorder %s26, 1
      %p254 = por %p252, %p253
      %p255 = scmp.ne.s32.totalorder %s246, %s247
      %p256 = scmp.eq.s32.totalorder %s26, 0
      %p257 = por %p255, %p256
      %p258 = scmp.ne.s32.totalorder %s246, %s247
      %p259 = scmp.eq.s32.totalorder %s27, 1
      %p260 = por %p258, %p259
      %p262 = scmp.ne.s32.totalorder %s247, %s261
      %p263 = scmp.eq.s32.totalorder %s27, 0
      %p264 = por %p262, %p263
      %s266 = sadd.s32 %s265, 1
      %p269 = scmp.eq.s32.totalorder %s21, 1
      %p270 = scmp.ne.s32.totalorder %s265, %s267
      %p271 = scmp.eq.s32.totalorder %s21, 0
      %p272 = por %p270, %p271
      %p273 = scmp.ne.s32.totalorder %s265, %s267
      %p274 = scmp.eq.s32.totalorder %s26, 1
      %p275 = por %p273, %p274
      %p276 = scmp.ne.s32.totalorder %s267, %s268
      %p277 = scmp.eq.s32.totalorder %s26, 0
      %p278 = por %p276, %p277
      %p279 = scmp.ne.s32.totalorder %s267, %s268
      %p280 = scmp.eq.s32.totalorder %s27, 1
      %p281 = por %p279, %p280
      %p283 = scmp.ne.s32.totalorder %s268, %s282
      %p284 = scmp.eq.s32.totalorder %s27, 0
      %p285 = por %p283, %p284
      %s286 = ssub.s32 %s21, %s28
      %p287 = scmp.eq.s32.totalorder %s286, 0
      %s289 = sadd.s32 %s288, 1
      %s290 = scalar_select %p287, %s288, %s289
      %p293 = pneg %p287
      %p294 = scmp.eq.s32.totalorder %s21, 1
      %p295 = por %p293, %p294
      %p296 = scmp.ne.s32.totalorder %s288, %s291
      %p297 = scmp.eq.s32.totalorder %s21, 0
      %p298 = por %p296, %p297
      %p299 = scmp.ne.s32.totalorder %s288, %s291
      %p300 = scmp.eq.s32.totalorder %s26, 1
      %p301 = por %p299, %p300
      %p302 = scmp.ne.s32.totalorder %s291, %s292
      %p303 = scmp.eq.s32.totalorder %s26, 0
      %p304 = por %p302, %p303
      %p305 = scmp.ne.s32.totalorder %s291, %s292
      %p306 = scmp.eq.s32.totalorder %s27, 1
      %p307 = por %p305, %p306
      %p309 = scmp.ne.s32.totalorder %s292, %s308
      %p310 = scmp.eq.s32.totalorder %s27, 0
      %p311 = por %p309, %p310
      %p312 = scmp.le.s32.totalorder 1, %s21
      %p313 = scmp.lt.s32.totalorder %s21, 3
      %p314 = pnand %p312, %p313
      %p315 = pneg %p314
      // Predicated region
      $region9: #{tpu_custom_call.1} parent=5 // pred_check
        _
      $region10: #{tpu_custom_call.1} parent=5 // pred_check_branch
        %317 = sbr.rel (%p314) target = $region12
      $region11: #{tpu_custom_call.1} parent=5 // pred_region
        %s318 = ssub.s32 %s21, 1
        // Predicated region
        $region13: #{tpu_custom_call.1} parent=11 // pred_check
          %p319 = pneg %p68
        $region14: #{tpu_custom_call.1} parent=11 // pred_check_branch
          %321 = sbr.rel (%p319) target = $region16
        $region15: #{tpu_custom_call.1} parent=11 // pred_region
          _
        $region16: #{tpu_custom_call.1} parent=11 // pred_fallthru
          _
        // Predicated region
        $region17: #{tpu_custom_call.1} parent=11 // pred_check
          %p322 = pneg %p89
        $region18: #{tpu_custom_call.1} parent=11 // pred_check_branch
          %324 = sbr.rel (%p322) target = $region20
        $region19: #{tpu_custom_call.1} parent=11 // pred_region
          _
        $region20: #{tpu_custom_call.1} parent=11 // pred_fallthru
          _
        // Predicated region
        $region21: #{tpu_custom_call.1} parent=11 // pred_check
          %p325 = pneg %p110
        $region22: #{tpu_custom_call.1} parent=11 // pred_check_branch
          %327 = sbr.rel (%p325) target = $region24
        $region23: #{tpu_custom_call.1} parent=11 // pred_region
          _
        $region24: #{tpu_custom_call.1} parent=11 // pred_fallthru
          _
        // Predicated region
        $region25: #{tpu_custom_call.1} parent=11 // pred_check
          %p328 = pneg %p131
        $region26: #{tpu_custom_call.1} parent=11 // pred_check_branch
          %330 = sbr.rel (%p328) target = $region28
        $region27: #{tpu_custom_call.1} parent=11 // pred_region
          _
        $region28: #{tpu_custom_call.1} parent=11 // pred_fallthru
          _
        // Predicated region
        $region29: #{tpu_custom_call.1} parent=11 // pred_check
          %p331 = pneg %p152
        $region30: #{tpu_custom_call.1} parent=11 // pred_check_branch
          %333 = sbr.rel (%p331) target = $region32
        $region31: #{tpu_custom_call.1} parent=11 // pred_region
          _
        $region32: #{tpu_custom_call.1} parent=11 // pred_fallthru
          _
        // Predicated region
        $region33: #{tpu_custom_call.1} parent=11 // pred_check
          %p334 = pneg %p173
        $region34: #{tpu_custom_call.1} parent=11 // pred_check_branch
          %336 = sbr.rel (%p334) target = $region36
        $region35: #{tpu_custom_call.1} parent=11 // pred_region
          _
        $region36: #{tpu_custom_call.1} parent=11 // pred_fallthru
          _
        // Predicated region
        $region37: #{tpu_custom_call.1} parent=11 // pred_check
          %p337 = pneg %p194
        $region38: #{tpu_custom_call.1} parent=11 // pred_check_branch
          %339 = sbr.rel (%p337) target = $region40
        $region39: #{tpu_custom_call.1} parent=11 // pred_region
          _
        $region40: #{tpu_custom_call.1} parent=11 // pred_fallthru
          _
        // Predicated region
        $region41: #{tpu_custom_call.1} parent=11 // pred_check
          %p340 = pneg %p215
        $region42: #{tpu_custom_call.1} parent=11 // pred_check_branch
          %342 = sbr.rel (%p340) target = $region44
        $region43: #{tpu_custom_call.1} parent=11 // pred_region
          _
        $region44: #{tpu_custom_call.1} parent=11 // pred_fallthru
          _
        // Predicated region
        $region45: #{tpu_custom_call.1} parent=11 // pred_check
          %p343 = pneg %p236
        $region46: #{tpu_custom_call.1} parent=11 // pred_check_branch
          %345 = sbr.rel (%p343) target = $region48
        $region47: #{tpu_custom_call.1} parent=11 // pred_region
          _
        $region48: #{tpu_custom_call.1} parent=11 // pred_fallthru
          _
        // Predicated region
        $region49: #{tpu_custom_call.1} parent=11 // pred_check
          %p346 = pneg %p257
        $region50: #{tpu_custom_call.1} parent=11 // pred_check_branch
          %348 = sbr.rel (%p346) target = $region52
        $region51: #{tpu_custom_call.1} parent=11 // pred_region
          _
        $region52: #{tpu_custom_call.1} parent=11 // pred_fallthru
          _
        // Predicated region
        $region53: #{tpu_custom_call.1} parent=11 // pred_check
          %p349 = pneg %p278
        $region54: #{tpu_custom_call.1} parent=11 // pred_check_branch
          %351 = sbr.rel (%p349) target = $region56
        $region55: #{tpu_custom_call.1} parent=11 // pred_region
          _
        $region56: #{tpu_custom_call.1} parent=11 // pred_fallthru
          _
      $region12: #{tpu_custom_call.1} parent=5 // pred_fallthru
        _
      %p352 = scmp.lt.s32.totalorder %s21, 2
      // Predicated region
      $region57: #{tpu_custom_call.1} parent=5 // pred_check
        %p353 = pneg %p352
      $region58: #{tpu_custom_call.1} parent=5 // pred_check_branch
        %355 = sbr.rel (%p353) target = $region60
      $region59: #{tpu_custom_call.1} parent=5 // pred_region
        // Predicated region
        $region61: #{tpu_custom_call.1} parent=59 // pred_check
          %p356 = pneg %p41
        $region62: #{tpu_custom_call.1} parent=59 // pred_check_branch
          %358 = sbr.rel (%p356) target = $region64
        $region63: #{tpu_custom_call.1} parent=59 // pred_region
          %p359 = scmp.lt.s32.totalorder %s21, 1
          %s360 = scalar_select %p359, %s21, 1
          %s361 = smul.addr %s360, 2
          %s362 = smul.addr %s361, 8
          %s363 = scalar_lea.vmem %s0, %s362
        $region64: #{tpu_custom_call.1} parent=59 // pred_fallthru
          _
      $region60: #{tpu_custom_call.1} parent=5 // pred_fallthru
        _
      %p364 = scmp.le.s32.totalorder 1, %s21
      %p365 = scmp.lt.s32.totalorder %s21, 3
      %p366 = pnand %p364, %p365
      %p367 = pneg %p366
      // Predicated region
      $region65: #{tpu_custom_call.1} parent=5 // pred_check
        _
      $region66: #{tpu_custom_call.1} parent=5 // pred_check_branch
        %369 = sbr.rel (%p366) target = $region68
      $region67: #{tpu_custom_call.1} parent=5 // pred_region
        %s370 = ssub.s32 %s21, 1
        %p371 = scmp.lt.s32.totalorder %s26, 1
        %s372 = scalar_select %p371, %s26, 1
        %s373 = smul.addr %s372, 2
        %s374 = smul.addr %s373, 8
        %s375 = scalar_lea.vmem %s0, %s374
        %p376 = pneg %p47
        %p377 = pneg %p44
        %p378 = pneg %p68
        %p379 = pneg %p65
        %p380 = pneg %p89
        %p381 = pneg %p86
        %p382 = pneg %p110
        %p383 = pneg %p107
        %p384 = pneg %p131
        %p385 = pneg %p128
        %p386 = pneg %p152
        %p387 = pneg %p149
        %p388 = pneg %p173
        %p389 = pneg %p170
        %p390 = pneg %p194
        %p391 = pneg %p191
        %p392 = pneg %p215
        %p393 = pneg %p212
        %p394 = pneg %p236
        %p395 = pneg %p233
        %p396 = pneg %p257
        %p397 = pneg %p254
        %p398 = pneg %p278
        %p399 = pneg %p275
        %p400 = pneg %p304
        %p401 = pneg %p301
        %s402 = sand.u32 %s291, 1
        %s403 = scalar_lea.sflag [#allocation6], %s402
        %s404 = sand.u32 %s291, 1
        %s405 = scalar_lea.vmem [#allocation5], %s404
        %p406 = scmp.lt.s32.totalorder %s26, 1
        %s407 = scalar_select %p406, %s26, 1
        %s408 = smul.addr %s407, 2
        %s409 = smul.addr %s408, 8
        %s410 = scalar_lea.vmem %s0, %s409
        %v412 = vld [vmem:[%s410] sm:$0xff]
        %v413 = vld [vmem:[%s410 + $0x8] sm:$0xff]
        %vm414 = vcmask 97280
        %415 = vst.msk [vmem:[#allocation2] sm:$0xff] %vm414, 0.0
        %416 = vst.msk [vmem:[#allocation2 + $0x8] sm:$0xff] %vm414, 0.0
        %vm417 = vcmask 31744
        %418 = vst.msk [vmem:[#allocation2 + $0x2] sm:$0xff] %vm417, %v412
        %vm419 = vcmask 29696
        %420 = vst.msk [vmem:[#allocation2 + $0xa] sm:$0x3f] %vm419, %v413
        %423 = vrot.lane.b32.xlu0 %v412, 4
        %v424 = vpop.permute.xlu0 %423
        %425 = vrot.lane.b32.xlu0 %v413, 4
        %v426 = vpop.permute.xlu0 %425
        %vm429 = vcmask 64544
        %430 = vst.msk [vmem:[#allocation2 + $0x1] sm:$0xff] %vm429, %v424
        %vm431 = vcmask 63520
        %432 = vst.msk [vmem:[#allocation2 + $0x9] sm:$0x7f] %vm431, %v426
        %433 = vrot.lane.b32.xlu0 %v412, 8
        %v434 = vpop.permute.xlu0 %433
        %435 = vrot.lane.b32.xlu0 %v413, 8
        %v436 = vpop.permute.xlu0 %435
        %vm439 = vcmask 97344
        %440 = vst.msk [vmem:[#allocation2] sm:$0xff] %vm439, %v434
        %441 = vst.msk [vmem:[#allocation2 + $0x8] sm:$0xff] %vm439, %v436
        %v442 = vld [vmem:[#allocation2] sm:$0xff]
        %v443 = vld [vmem:[#allocation2 + $0x8] sm:$0xff]
        %v444 = vpack.c.bf16 %v443, %v442
        %v445 = vld [vmem:[%s1] sm:$0xf]
        %v446 = vld [vmem:[%s1 + $0x4] sm:$0x3]
        %v447 = vld [vmem:[%s2] sm:$0x1]
        %v449 = vlaneseq
        %v450 = vshrl.u32 %v449, 7
        %v451 = vsub.s32 0, %v450
        %v452 = vrot.slane %v447, %v451
        %v456 = vunpack.c.l.b16 %v445
        %v457 = vunpack.c.l.b16 %v446
        %v458 = vpack.c.b16 %v457, %v456
        %v460 = vsel %vm414, %v444, 0
        %vm462 = vcmask 1045504
        %v464 = vsel %vm462, %v458, 0
        %466 = vmatprep.subr.bf16.mxu0 0
        %467 = vmatpush1.bf16.msra.mxu0 %v464
        %468 = vmatprep.subr.bf16.mxu0 0
        %469 = vmatpush1.bf16.msra.mxu0 0
        %470 = vmatprep.subr.bf16.mxu0 0
        %471 = vmatpush1.bf16.msra.mxu0 0
        %472 = vmatprep.subr.bf16.mxu0 0
        %473 = vmatpush1.bf16.msra.mxu0 0
        %474 = vmatprep.subr.bf16.mxu0 0
        %475 = vmatpush1.bf16.msra.mxu0 0
        %476 = vmatprep.subr.bf16.mxu0 0
        %477 = vmatpush1.bf16.msra.mxu0 0
        %478 = vmatprep.subr.bf16.mxu0 0
        %479 = vmatpush1.bf16.msra.mxu0 0
        %480 = vmatprep.subr.bf16.mxu0 0
        %481 = vmatpush1.bf16.msra.mxu0 0
        %482 = vmatprep.subr.bf16.mxu0 0
        %483 = vmatpush1.bf16.msra.mxu0 0
        %484 = vmatprep.subr.bf16.mxu0 0
        %485 = vmatpush1.bf16.msra.mxu0 0
        %486 = vmatprep.subr.bf16.mxu0 0
        %487 = vmatpush1.bf16.msra.mxu0 0
        %488 = vmatprep.subr.bf16.mxu0 0
        %489 = vmatpush1.bf16.msra.mxu0 0
        %490 = vmatprep.subr.bf16.mxu0 0
        %491 = vmatpush1.bf16.msra.mxu0 0
        %492 = vmatprep.subr.bf16.mxu0 0
        %493 = vmatpush1.bf16.msra.mxu0 0
        %494 = vmatprep.subr.bf16.mxu0 0
        %495 = vmatpush1.bf16.msra.mxu0 0
        %496 = vmatprep.subr.bf16.mxu0 0
        %497 = vmatpush1.bf16.msra.mxu0 0
        %498 = vmatprep.mubr.bf16.mxu0 0
        %499 = vmatmul.mubr.bf16.gmra.mrb[0].mxu0 %v460
        %v500 = vpop.f32.mrb[0].mxu0
        %v501 = vadd.f32 %v452, %v500
        %v502 = vpop.f32.mrb[0].mxu0
        %v503 = vpop.f32.mrb[0].mxu0
        %v504 = vadd.f32 %v452, %v503
        %v505 = vpop.f32.mrb[0].mxu0
        %506 = vdwg.mxu0
        %v507 = vmul.f32 %v501, 0.5
        %v508 = vmul.f32 %v504, 0.5
        %v509 = vmul.f32 %v501, 0.70710677
        %v510 = vmul.f32 %v504, 0.70710677
        %v511 = verf.f32.pop %v509
        %v512 = verf.f32.pop %v510
        %v513 = vadd.f32 %v511, 1.0
        %v514 = vadd.f32 %v512, 1.0
        %v515 = vmul.f32 %v507, %v513
        %v516 = vmul.f32 %v508, %v514
        %519 = vrot.lane.b32.xlu0 %v501, 96
        %v520 = vpop.permute.xlu0 %519
        %521 = vrot.lane.b32.xlu0 %v504, 96
        %v522 = vpop.permute.xlu0 %521
        %v525 = vadd.f32 %v515, %v520
        %v526 = vadd.f32 %v516, %v522
        %vm527 = vcmask 785408
        %528 = vst.msk [vmem:[#allocation3] sm:$0xff] %vm527, 0.0
        %529 = vst.msk [vmem:[#allocation3 + $0x8] sm:$0xff] %vm527, 0.0
        %vm530 = vcmask 261120
        %531 = vst.msk [vmem:[#allocation3 + $0x4] sm:$0xff] %vm530, %v525
        %vm532 = vcmask 257024
        %533 = vst.msk [vmem:[#allocation3 + $0xc] sm:$0xf] %vm532, %v526
        %536 = vrot.lane.b32.xlu0 %v525, 32
        %v537 = vpop.permute.xlu0 %536
        %538 = vrot.lane.b32.xlu0 %v526, 32
        %v539 = vpop.permute.xlu0 %538
        %vm542 = vcmask 523520
        %543 = vst.msk [vmem:[#allocation3 + $0x2] sm:$0xff] %vm542, %v537
        %vm544 = vcmask 521472
        %545 = vst.msk [vmem:[#allocation3 + $0xa] sm:$0x3f] %vm544, %v539
        %546 = vrot.lane.b32.xlu0 %v525, 64
        %v547 = vpop.permute.xlu0 %546
        %548 = vrot.lane.b32.xlu0 %v526, 64
        %v549 = vpop.permute.xlu0 %548
        %vm552 = vcmask 785920
        %553 = vst.msk [vmem:[#allocation3] sm:$0xff] %vm552, %v547
        %554 = vst.msk [vmem:[#allocation3 + $0x8] sm:$0xff] %vm552, %v549
        %v555 = vld [vmem:[#allocation3] sm:$0xff]
        %v556 = vld [vmem:[#allocation3 + $0x8] sm:$0xff]
        %v557 = vpack.c.bf16 %v556, %v555
        %v558 = vld [vmem:[%s3] sm:$0xf]
        %v559 = vld [vmem:[%s3 + $0x4] sm:$0xf]
        %v560 = vld [vmem:[%s3 + $0x8] sm:$0xf]
        %v561 = vld [vmem:[%s3 + $0xc] sm:$0xf]
        %v562 = vld [vmem:[%s3 + $0x10] sm:$0xf]
        %v563 = vld [vmem:[%s3 + $0x14] sm:$0xf]
        %v564 = vld [vmem:[%s3 + $0x18] sm:$0xf]
        %v565 = vld [vmem:[%s3 + $0x1c] sm:$0xf]
        %v566 = vld [vmem:[%s3 + $0x20] sm:$0xf]
        %v567 = vld [vmem:[%s3 + $0x24] sm:$0xf]
        %v568 = vld [vmem:[%s3 + $0x28] sm:$0xf]
        %v569 = vld [vmem:[%s3 + $0x2c] sm:$0xf]
        %v570 = vld [vmem:[%s4] sm:$0x1]
        %v572 = vlaneseq
        %v573 = vshrl.u32 %v572, 7
        %v574 = vsub.s32 0, %v573
        %v575 = vrot.slane %v570, %v574
        %v589 = vunpack.c.l.b16 %v558
        %v590 = vunpack.c.l.b16 %v559
        %v591 = vunpack.c.l.b16 %v560
        %v592 = vunpack.c.l.b16 %v561
        %v593 = vunpack.c.l.b16 %v562
        %v594 = vunpack.c.l.b16 %v563
        %v595 = vunpack.c.l.b16 %v564
        %v596 = vunpack.c.l.b16 %v565
        %v597 = vunpack.c.l.b16 %v566
        %v598 = vunpack.c.l.b16 %v567
        %v599 = vunpack.c.l.b16 %v568
        %v600 = vunpack.c.l.b16 %v569
        %v601 = vpack.c.b16 %v590, %v589
        %v602 = vpack.c.b16 %v592, %v591
        %v603 = vpack.c.b16 %v594, %v593
        %v604 = vpack.c.b16 %v596, %v595
        %v605 = vpack.c.b16 %v598, %v597
        %v606 = vpack.c.b16 %v600, %v599
        %v614 = vsel %vm527, %v557, 0
        %616 = vmatprep.subr.bf16.mxu0 0
        %617 = vmatpush1.bf16.msra.mxu0 %v601
        %618 = vmatprep.subr.bf16.mxu0 0
        %619 = vmatpush1.bf16.msra.mxu0 %v602
        %620 = vmatprep.subr.bf16.mxu0 0
        %621 = vmatpush1.bf16.msra.mxu0 %v603
        %622 = vmatprep.subr.bf16.mxu0 0
        %623 = vmatpush1.bf16.msra.mxu0 %v604
        %624 = vmatprep.subr.bf16.mxu0 0
        %625 = vmatpush1.bf16.msra.mxu0 %v605
        %626 = vmatprep.subr.bf16.mxu0 0
        %627 = vmatpush1.bf16.msra.mxu0 %v606
        %628 = vmatprep.subr.bf16.mxu0 0
        %629 = vmatpush1.bf16.msra.mxu0 0
        %630 = vmatprep.subr.bf16.mxu0 0
        %631 = vmatpush1.bf16.msra.mxu0 0
        %632 = vmatprep.subr.bf16.mxu0 0
        %633 = vmatpush1.bf16.msra.mxu0 0
        %634 = vmatprep.subr.bf16.mxu0 0
        %635 = vmatpush1.bf16.msra.mxu0 0
        %636 = vmatprep.subr.bf16.mxu0 0
        %637 = vmatpush1.bf16.msra.mxu0 0
        %638 = vmatprep.subr.bf16.mxu0 0
        %639 = vmatpush1.bf16.msra.mxu0 0
        %640 = vmatprep.subr.bf16.mxu0 0
        %641 = vmatpush1.bf16.msra.mxu0 0
        %642 = vmatprep.subr.bf16.mxu0 0
        %643 = vmatpush1.bf16.msra.mxu0 0
        %644 = vmatprep.subr.bf16.mxu0 0
        %645 = vmatpush1.bf16.msra.mxu0 0
        %646 = vmatprep.subr.bf16.mxu0 0
        %647 = vmatpush1.bf16.msra.mxu0 0
        %648 = vmatprep.mubr.bf16.mxu0 0
        %649 = vmatmul.mubr.bf16.gmra.mrb[0].mxu0 %v614
        %v650 = vpop.f32.mrb[0].mxu0
        %v651 = vadd.f32 %v575, %v650
        %v652 = vpop.f32.mrb[0].mxu0
        %v653 = vpop.f32.mrb[0].mxu0
        %v654 = vadd.f32 %v575, %v653
        %v655 = vpop.f32.mrb[0].mxu0
        %656 = vdwg.mxu0
        %v657 = vmul.f32 %v651, 0.5
        %v658 = vmul.f32 %v654, 0.5
        %v659 = vmul.f32 %v651, 0.70710677
        %v660 = vmul.f32 %v654, 0.70710677
        %v661 = verf.f32.pop %v659
        %v662 = verf.f32.pop %v660
        %v663 = vadd.f32 %v661, 1.0
        %v664 = vadd.f32 %v662, 1.0
        %v665 = vmul.f32 %v657, %v663
        %v666 = vmul.f32 %v658, %v664
        %v667 = vadd.f32 %v665, %v525
        %v668 = vadd.f32 %v666, %v526
        %669 = vst.msk [vmem:[#allocation4] sm:$0xff] %vm527, 0.0
        %670 = vst.msk [vmem:[#allocation4 + $0x8] sm:$0xff] %vm527, 0.0
        %671 = vst.msk [vmem:[#allocation4 + $0x8] sm:$0xff] %vm530, %v667
        %674 = vrot.lane.b32.xlu0 %v667, 32
        %v675 = vpop.permute.xlu0 %674
        %676 = vrot.lane.b32.xlu0 %v668, 32
        %v677 = vpop.permute.xlu0 %676
        %680 = vst.msk [vmem:[#allocation4 + $0x4] sm:$0xff] %vm542, %v675
        %vm681 = vcmask 519424
        %682 = vst.msk [vmem:[#allocation4 + $0xc] sm:$0xf] %vm681, %v677
        %683 = vrot.lane.b32.xlu0 %v667, 64
        %v684 = vpop.permute.xlu0 %683
        %685 = vrot.lane.b32.xlu0 %v668, 64
        %v686 = vpop.permute.xlu0 %685
        %689 = vst.msk [vmem:[#allocation4] sm:$0xff] %vm552, %v684
        %690 = vst.msk [vmem:[#allocation4 + $0x8] sm:$0xff] %vm552, %v686
        %v691 = vld [vmem:[#allocation4] sm:$0xff]
        %v692 = vld [vmem:[#allocation4 + $0x8] sm:$0xff]
        %v693 = vpack.c.bf16 %v692, %v691
        %v694 = vld [vmem:[%s5] sm:$0xf]
        %v695 = vld [vmem:[%s5 + $0x4] sm:$0xf]
        %v696 = vld [vmem:[%s5 + $0x8] sm:$0xf]
        %v697 = vld [vmem:[%s5 + $0xc] sm:$0xf]
        %v698 = vld [vmem:[%s5 + $0x10] sm:$0xf]
        %v699 = vld [vmem:[%s5 + $0x14] sm:$0xf]
        %v700 = vld [vmem:[%s5 + $0x18] sm:$0xf]
        %v701 = vld [vmem:[%s5 + $0x1c] sm:$0xf]
        %v702 = vld [vmem:[%s5 + $0x20] sm:$0xf]
        %v703 = vld [vmem:[%s5 + $0x24] sm:$0xf]
        %v704 = vld [vmem:[%s5 + $0x28] sm:$0xf]
        %v705 = vld [vmem:[%s5 + $0x2c] sm:$0xf]
        %v706 = vld [vmem:[%s6] sm:$0x1]
        %v708 = vlaneseq
        %v709 = vshrl.u32 %v708, 7
        %v710 = vsub.s32 0, %v709
        %v711 = vrot.slane %v706, %v710
        %v725 = vunpack.c.l.b16 %v694
        %v726 = vunpack.c.l.b16 %v695
        %v727 = vunpack.c.l.b16 %v696
        %v728 = vunpack.c.l.b16 %v697
        %v729 = vunpack.c.l.b16 %v698
        %v730 = vunpack.c.l.b16 %v699
        %v731 = vunpack.c.l.b16 %v700
        %v732 = vunpack.c.l.b16 %v701
        %v733 = vunpack.c.l.b16 %v702
        %v734 = vunpack.c.l.b16 %v703
        %v735 = vunpack.c.l.b16 %v704
        %v736 = vunpack.c.l.b16 %v705
        %v737 = vpack.c.b16 %v726, %v725
        %v738 = vpack.c.b16 %v728, %v727
        %v739 = vpack.c.b16 %v730, %v729
        %v740 = vpack.c.b16 %v732, %v731
        %v741 = vpack.c.b16 %v734, %v733
        %v742 = vpack.c.b16 %v736, %v735
        %v750 = vsel %vm527, %v693, 0
        %752 = vmatprep.subr.bf16.mxu0 0
        %753 = vmatpush1.bf16.msra.mxu0 %v737
        %754 = vmatprep.subr.bf16.mxu0 0
        %755 = vmatpush1.bf16.msra.mxu0 %v738
        %756 = vmatprep.subr.bf16.mxu0 0
        %757 = vmatpush1.bf16.msra.mxu0 %v739
        %758 = vmatprep.subr.bf16.mxu0 0
        %759 = vmatpush1.bf16.msra.mxu0 %v740
        %760 = vmatprep.subr.bf16.mxu0 0
        %761 = vmatpush1.bf16.msra.mxu0 %v741
        %762 = vmatprep.subr.bf16.mxu0 0
        %763 = vmatpush1.bf16.msra.mxu0 %v742
        %764 = vmatprep.subr.bf16.mxu0 0
        %765 = vmatpush1.bf16.msra.mxu0 0
        %766 = vmatprep.subr.bf16.mxu0 0
        %767 = vmatpush1.bf16.msra.mxu0 0
        %768 = vmatprep.subr.bf16.mxu0 0
        %769 = vmatpush1.bf16.msra.mxu0 0
        %770 = vmatprep.subr.bf16.mxu0 0
        %771 = vmatpush1.bf16.msra.mxu0 0
        %772 = vmatprep.subr.bf16.mxu0 0
        %773 = vmatpush1.bf16.msra.mxu0 0
        %774 = vmatprep.subr.bf16.mxu0 0
        %775 = vmatpush1.bf16.msra.mxu0 0
        %776 = vmatprep.subr.bf16.mxu0 0
        %777 = vmatpush1.bf16.msra.mxu0 0
        %778 = vmatprep.subr.bf16.mxu0 0
        %779 = vmatpush1.bf16.msra.mxu0 0
        %780 = vmatprep.subr.bf16.mxu0 0
        %781 = vmatpush1.bf16.msra.mxu0 0
        %782 = vmatprep.subr.bf16.mxu0 0
        %783 = vmatpush1.bf16.msra.mxu0 0
        %784 = vmatprep.mubr.bf16.mxu0 0
        %785 = vmatmul.mubr.bf16.gmra.mrb[0].mxu0 %v750
        %v786 = vpop.f32.mrb[0].mxu0
        %v787 = vpop.f32.mrb[0].mxu0
        %v788 = vpop.f32.mrb[0].mxu0
        %v789 = vadd.f32 %v711, %v788
        %v790 = vpop.f32.mrb[0].mxu0
        %791 = vdwg.mxu0
        %v792 = vmul.f32 %v789, 0.5
        %v793 = vmul.f32 %v789, 0.70710677
        %v794 = verf.f32.pop %v793
        %v795 = vadd.f32 %v794, 1.0
        %v796 = vmul.f32 %v792, %v795
        %v797 = vadd.f32 %v796, %v668
        %vm798 = vcmask 261127
        %v799 = vsel %vm798, %v797, 0.0
        %800 = vadd.xlane.f32.xlu0 %v799
        %v801 = vpop.xlane.xlu0 %800
        %v802 = vrcp.pop 32.0
        %v803 = vmul.f32 %v801, %v802
        %v804 = vsub.f32 %v797, %v803
        %v805 = vmul.f32 %v804, %v804
        %v806 = vsel %vm798, %v805, 0.0
        %807 = vadd.xlane.f32.xlu0 %v806
        %v808 = vpop.xlane.xlu0 %807
        %v809 = vmul.f32 %v808, %v802
        %v810 = vadd.f32 %v809, 1e-05
        %v811 = vrsqrt.pop %v810
        %v812 = vmul.f32 %v804, %v811
        %v813 = vld [vmem:[%s7] sm:$0x1]
        %v815 = vlaneseq
        %v816 = vshrl.u32 %v815, 7
        %v817 = vsub.s32 0, %v816
        %v818 = vrot.slane %v813, %v817
        %v820 = vmul.f32 %v812, %v818
        %v821 = vld [vmem:[%s8] sm:$0x1]
        %v823 = vlaneseq
        %v824 = vshrl.u32 %v823, 7
        %v825 = vsub.s32 0, %v824
        %v826 = vrot.slane %v821, %v825
        %v828 = vadd.f32 %v820, %v826
        %v829 = vpack.c.bf16 %v828, %v828
        %v830 = vld [vmem:[%s9] sm:$0xf]
        %v831 = vld [vmem:[%s9 + $0x4] sm:$0xf]
        %v832 = vld [vmem:[%s9 + $0x8] sm:$0xf]
        %v833 = vld [vmem:[%s9 + $0xc] sm:$0xf]
        %v834 = vld [vmem:[%s10] sm:$0x1]
        %v836 = vshrl.u32 %v829, 16
        %v838 = vrot.slane %v836, 3
        %v843 = vunpack.c.l.b16 %v830
        %v844 = vunpack.c.l.b16 %v831
        %v845 = vunpack.c.l.b16 %v832
        %v846 = vunpack.c.l.b16 %v833
        %v847 = vpack.c.b16 %v844, %v843
        %v848 = vpack.c.b16 %v846, %v845
        %v852 = vsel %vm530, %v838, 0
        %854 = vmatprep.subr.bf16.mxu0 0
        %855 = vmatpush1.bf16.msra.mxu0 %v847
        %856 = vmatprep.subr.bf16.mxu0 0
        %857 = vmatpush1.bf16.msra.mxu0 %v848
        %858 = vmatprep.subr.bf16.mxu0 0
        %859 = vmatpush1.bf16.msra.mxu0 0
        %860 = vmatprep.subr.bf16.mxu0 0
        %861 = vmatpush1.bf16.msra.mxu0 0
        %862 = vmatprep.subr.bf16.mxu0 0
        %863 = vmatpush1.bf16.msra.mxu0 0
        %864 = vmatprep.subr.bf16.mxu0 0
        %865 = vmatpush1.bf16.msra.mxu0 0
        %866 = vmatprep.subr.bf16.mxu0 0
        %867 = vmatpush1.bf16.msra.mxu0 0
        %868 = vmatprep.subr.bf16.mxu0 0
        %869 = vmatpush1.bf16.msra.mxu0 0
        %870 = vmatprep.subr.bf16.mxu0 0
        %871 = vmatpush1.bf16.msra.mxu0 0
        %872 = vmatprep.subr.bf16.mxu0 0
        %873 = vmatpush1.bf16.msra.mxu0 0
        %874 = vmatprep.subr.bf16.mxu0 0
        %875 = vmatpush1.bf16.msra.mxu0 0
        %876 = vmatprep.subr.bf16.mxu0 0
        %877 = vmatpush1.bf16.msra.mxu0 0
        %878 = vmatprep.subr.bf16.mxu0 0
        %879 = vmatpush1.bf16.msra.mxu0 0
        %880 = vmatprep.subr.bf16.mxu0 0
        %881 = vmatpush1.bf16.msra.mxu0 0
        %882 = vmatprep.subr.bf16.mxu0 0
        %883 = vmatpush1.bf16.msra.mxu0 0
        %884 = vmatprep.subr.bf16.mxu0 0
        %885 = vmatpush1.bf16.msra.mxu0 0
        %886 = vmatprep.mubr.bf16.mxu0 0
        %887 = vmatmul.mubr.bf16.gmra.mrb[0].mxu0 %v852
        %v888 = vpop.f32.mrb[0].mxu0
        %v889 = vadd.f32 %v834, %v888
        %v890 = vpop.f32.mrb[0].mxu0
        %v891 = vpop.f32.mrb[0].mxu0
        %v892 = vpop.f32.mrb[0].mxu0
        %893 = vdwg.mxu0
        %v894 = vld [vmem:[%s11] sm:$0x1]
        %v895 = vmax.f32 %v889, 0.0
        %vm896 = vcmp.ne.f32.partialorder %v889, %v889
        %v897 = vadd.f32 %v889, 0.0
        %v898 = vand.u32 2147483647, %v889
        %v899 = vsub.f32 0.0, %v898
        %v900 = vmul.f32 %v899, 1.442695
        %v901 = vpow.pop %v900
        %v902 = vadd.f32 %v901, 1.0
        %v903 = vlog2.pop %v902
        %v904 = vmul.f32 %v903, 0.6931472
        %v905 = vmul.f32 -0.5, %v901
        %v906 = vadd.f32 %v905, 1.0
        %v907 = vmul.f32 %v906, %v901
        %v908 = vand.u32 2147483647, %v901
        %vm909 = vcmp.lt.f32.partialorder %v908, 0.0004427343
        %v910 = vsel %vm909, %v907, %v904
        %v911 = vadd.f32 %v895, %v910
        %v912 = vsel %vm896, %v897, %v911
        %v913 = vadd.f32 %v912, 1e-06
        %v914 = vsub.f32 %v913, %v889
        %v915 = vmul.f32 %v894, %v914
        %v916 = vadd.f32 %v889, %v915
        %917 = vst [vmem:[%s405] sm:$0x1] %v916
        %s918 = sand.u32 %s291, 1
        %s919 = scalar_lea.sflag [#allocation6], %s918
        %s920 = sand.u32 %s291, 1
        %s921 = scalar_lea.vmem [#allocation5], %s920
        // Predicated region
        $region69: #{tpu_custom_call.1} parent=67 // pred_check
          %p922 = pneg %p301
        $region70: #{tpu_custom_call.1} parent=67 // pred_check_branch
          %924 = sbr.rel (%p922) target = $region72
        $region71: #{tpu_custom_call.1} parent=67 // pred_region
          %s926 = ssub.s32 16, 16
          %927 = vsyncadd %s919, %s926
          %s928 = smul.addr %s26, 16
          %s929 = scalar_lea.hbm %s12, %s928
          %s931 = sshll.u32 %s921, 4
          %s932 = int_to_ptr.vmem [resolvable:$true] %s931
          %934 = dma.vmem_to_hbm [thread:$0]  %s932, 16, %s929, %s919
        $region72: #{tpu_custom_call.1} parent=67 // pred_fallthru
          _
      $region68: #{tpu_custom_call.1} parent=5 // pred_fallthru
        _
      %p935 = scmp.le.s32.totalorder 2, %s21
      // Predicated region
      $region73: #{tpu_custom_call.1} parent=5 // pred_check
        %p936 = pneg %p935
      $region74: #{tpu_custom_call.1} parent=5 // pred_check_branch
        %938 = sbr.rel (%p936) target = $region76
      $region75: #{tpu_custom_call.1} parent=5 // pred_region
        %s939 = ssub.s32 %s21, 2
        // Predicated region
        $region77: #{tpu_custom_call.1} parent=75 // pred_check
          %p940 = pneg %p307
        $region78: #{tpu_custom_call.1} parent=75 // pred_check_branch
          %942 = sbr.rel (%p940) target = $region80
        $region79: #{tpu_custom_call.1} parent=75 // pred_region
          %s943 = sand.u32 %s292, 1
          %s944 = scalar_lea.sflag [#allocation6], %s943
          %s945 = sand.u32 %s292, 1
          %s946 = scalar_lea.vmem [#allocation5], %s945
          %947 = dma.done %s944, 16
        $region80: #{tpu_custom_call.1} parent=75 // pred_fallthru
          _
      $region76: #{tpu_custom_call.1} parent=5 // pred_fallthru
        _
    $region6: #{tpu_custom_call.1} parent=1 // loop_footer
      %s25 = sadd.s32 1, %s21
    $region7: #{tpu_custom_call.1} parent=1 // loop_footer_branch
      %20 = sbr.rel target = $region3
    $region8: #{tpu_custom_call.1} parent=1 // loop_exit
      _
    %948 = vsyncpa [#allocation6], 1
    %s949 = scalar_lea.sflag [#allocation6], 1
    %950 = vsyncpa %s949, 1

</llo_original>
